<compile_context>
chip_gen: v5e
topology: v5e:2x2
jax: 0.10.0
libtpu: 0.0.40
codegen_flags: <defaults>
</compile_context>

<pallas_src>
import jax
import jax.numpy as jnp
from jax import lax
from jax.experimental import pallas as pl
from jax.experimental.pallas import tpu as pltpu


_LANE = 128    # TPU lane width; batch tiles are multiples of this.
_CHUNK = 256   # inner lane chunk: h1 per chunk = (64, 256) f32 = 16 vregs.


def _make_mlp_kernel(n_chunks: int, chunk: int):
    """Kernel for one (2, tile) -> (1, tile) batch tile, tile = n_chunks * chunk."""

    def kernel(x_ref, w1_ref, b1_ref, w2_ref, b2_ref, w3_ref, b3_ref, o_ref):
        # Tiny parameters: load once per grid step, hoisted out of the chunk loop.
        w1 = w1_ref[...]          # (64, 2)
        b1 = b1_ref[...]          # (64, 1)
        w2 = w2_ref[...]          # (32, 64)
        b2 = b2_ref[...]          # (32, 1)
        w3 = w3_ref[...]          # (32, 1)
        b3 = b3_ref[...]          # (1, 1)

        def chunk_body(c):
            if isinstance(c, int):                      # static offset (no loop)
                off = c * chunk
            else:                                       # loop index: aligned dynamic offset
                off = pl.multiple_of(c * chunk, chunk)
            x = x_ref[:, pl.ds(off, chunk)]             # (2, chunk), batch on lanes

            # Layer 1 (K=2): two broadcast FMAs on the VPU (MXU would need K padded
            # to 8 -> 4x input HBM traffic; kept on the VPU).
            h1 = w1[:, 0:1] * x[0:1, :] + w1[:, 1:2] * x[1:2, :] + b1
            h1 = jnp.maximum(h1, 0.0)                   # (64, chunk)

            # Layer 2 (64 -> 32): the one real matmul -> MXU, f32 accumulate.
            h2 = jnp.dot(w2, h1, preferred_element_type=jnp.float32)
            h2 = jnp.maximum(h2 + b2, 0.0)              # (32, chunk)

            # Layer 3 (N=1): VPU multiply + sublane reduction -> lane-dense row.
            o = jnp.sum(w3 * h2, axis=0, keepdims=True) + b3
            o_ref[:, pl.ds(off, chunk)] = o.astype(o_ref.dtype)

        if n_chunks == 1:
            chunk_body(0)
        else:
            def body(c, carry):
                chunk_body(c)
                return carry
            # Unrolled so the scheduler can overlap MXU / VPU / XLU across chunks
            # while per-chunk temporaries stay bounded (no vreg spills).
            lax.fori_loop(0, n_chunks, body, 0, unroll=(n_chunks <= 64))

    return kernel


def mlp_forward(x, w1, b1, w2, b2, w3, b3, *, tm=8192):
    """x: (n, 2); w*: (in_features, out_features); b*: (1, out_features).

    Returns (n, 1), matching the PyTorch Model's forward.
    """
    n, d_in = x.shape
    assert d_in == 2

    # --- Tile-size selection -------------------------------------------------
    # tm clamped to [128, 32768] and a multiple of 128.  VMEM is never close to
    # binding ((2+1)*tile*4B double-buffered I/O), even with v7x's 64 MiB.
    tm_cap = max(_LANE, (min(int(tm), 32768) // _LANE) * _LANE)
    n128 = max(_LANE, pl.cdiv(n, _LANE) * _LANE)

    if n128 <= tm_cap:
        grid_len = 1
        tile = n128
    else:
        # Keep the grid even so v7x's 2 TensorCores get a balanced parallel split.
        grid_len = pl.cdiv(n128, tm_cap)
        if grid_len % 2:
            grid_len += 1
        tile = pl.cdiv(pl.cdiv(n128, grid_len), _LANE) * _LANE

    chunk = min(_CHUNK, tile)
    tile = pl.cdiv(tile, chunk) * chunk            # tile is a multiple of chunk
    n_pad = grid_len * tile

    # --- Kernel-side layouts -------------------------------------------------
    # Batch on lanes: x^T (2, n_pad); pad the batch remainder in one op.
    x_t = x.T
    if n_pad != n:
        x_t = jnp.pad(x_t, ((0, 0), (0, n_pad - n)))

    w1_k = w1.T          # (64, 2)
    b1_k = b1.T          # (64, 1)
    w2_k = w2.T          # (32, 64)
    b2_k = b2.T          # (32, 1)
    w3_k = w3            # (32, 1)
    b3_k = b3            # (1, 1)

    def batch_map(i):
        return (0, i)

    def param_map(i):
        return (0, 0)

    param_bytes = sum(p.size for p in (w1_k, b1_k, w2_k, b2_k, w3_k, b3_k)) * 4
    cost = pl.CostEstimate(
        flops=n_pad * (2 * 2 * 64 + 2 * 64 * 32 + 2 * 32),
        transcendentals=0,
        bytes_accessed=(x_t.size + n_pad) * 4 + param_bytes,
    )

    out = pl.pallas_call(
        _make_mlp_kernel(tile // chunk, chunk),
        out_shape=jax.ShapeDtypeStruct((1, n_pad), x.dtype),
        grid=(grid_len,),
        in_specs=[
            pl.BlockSpec((2, tile), batch_map),    # x^T tile  (2, tile)
            pl.BlockSpec((64, 2), param_map),      # W1^T
            pl.BlockSpec((64, 1), param_map),      # b1
            pl.BlockSpec((32, 64), param_map),     # W2^T
            pl.BlockSpec((32, 1), param_map),      # b2
            pl.BlockSpec((32, 1), param_map),      # W3
            pl.BlockSpec((1, 1), param_map),       # b3
        ],
        out_specs=pl.BlockSpec((1, tile), batch_map),   # lane-dense output slab
        compiler_params=pltpu.CompilerParams(
            dimension_semantics=("parallel",),          # megacore-shardable on v7x
        ),
        cost_estimate=cost,
    )(x_t, w1_k, b1_k, w2_k, b2_k, w3_k, b3_k)

    # Back to the PyTorch output layout (n, 1), dropping batch padding.
    return out[0, :n][:, None]


def init_params(key):
    # Deterministic init, mimicking PyTorch's uniform(-1/sqrt(fan_in), ...).
    def linear(key, fan_in, fan_out):
        kw, kb = jax.random.split(key)
        bound = 1.0 / jnp.sqrt(fan_in)
        w = jax.random.uniform(kw, (fan_in, fan_out), jnp.float32, -bound, bound)
        b = jax.random.uniform(kb, (1, fan_out), jnp.float32, -bound, bound)
        return w, b

    k1, k2, k3 = jax.random.split(key, 3)
    w1, b1 = linear(k1, 2, 64)
    w2, b2 = linear(k2, 64, 32)
    w3, b3 = linear(k3, 32, 1)
    return w1, b1, w2, b2, w3, b3


def _reference(x, w1, b1, w2, b2, w3, b3):
    h = jnp.maximum(x @ w1 + b1, 0.0)
    h = jnp.maximum(h @ w2 + b2, 0.0)
    return h @ w3 + b3


if __name__ == "__main__":
    key = jax.random.PRNGKey(0)
    kx, kp, kx2 = jax.random.split(key, 3)
    params = init_params(kp)

    # Small input consistent with the module: (batch, 2) points (spiral xy).
    x = jax.random.normal(kx, (16, 2), dtype=jnp.float32)
    out = jax.block_until_ready(mlp_forward(x, *params))
    ref = _reference(x, *params)
    assert out.shape == (16, 1)
    assert jnp.allclose(out, ref, atol=1e-4, rtol=1e-4)

    # Non-multiple-of-tile batch with a small explicit tm: exercises lane
    # padding, an even grid (v7x shaping), and the inner chunk loop.
    x2 = jax.random.normal(kx2, (2560, 2), dtype=jnp.float32)
    out2 = jax.block_until_ready(mlp_forward(x2, *params, tm=1024))
    ref2 = _reference(x2, *params)
    assert out2.shape == (2560, 1)
    assert jnp.allclose(out2, ref2, atol=1e-4, rtol=1e-4)

    # Default (large) tile: single grid step, multi-chunk inner loop.
    out3 = jax.block_until_ready(mlp_forward(x2, *params))
    assert out3.shape == (2560, 1)
    assert jnp.allclose(out3, ref2, atol=1e-4, rtol=1e-4)

    print("KERNEL_OK")
</pallas_src>

<mosaic_0001>
module attributes {stable_mosaic.version = 11 : i64} {
  func.func @kernel(%arg0: i32, %arg1: memref<2x128xf32, #tpu.memory_space<vmem>>, %arg2: memref<64x2xf32, #tpu.memory_space<vmem>>, %arg3: memref<64x1xf32, #tpu.memory_space<vmem>>, %arg4: memref<32x64xf32, #tpu.memory_space<vmem>>, %arg5: memref<32x1xf32, #tpu.memory_space<vmem>>, %arg6: memref<32x1xf32, #tpu.memory_space<vmem>>, %arg7: memref<1x1xf32, #tpu.memory_space<vmem>>, %arg8: memref<1x128xf32, #tpu.memory_space<vmem>>) attributes {dimension_semantics = [#tpu.dimension_semantics<parallel>], iteration_bounds = array<i64: 1>, scalar_prefetch = 0 : i64, scratch_operands = 0 : i64, tpu.core_type = #tpu.core_type<tc>, window_params = [{transform_indices = @transform_0, window_bounds = array<i64: 2, 128>}, {pipeline_mode = #tpu.pipeline_mode<synchronous>, transform_indices = @transform_1, window_bounds = array<i64: 64, 2>}, {pipeline_mode = #tpu.pipeline_mode<synchronous>, transform_indices = @transform_2, window_bounds = array<i64: 64, 1>}, {pipeline_mode = #tpu.pipeline_mode<synchronous>, transform_indices = @transform_3, window_bounds = array<i64: 32, 64>}, {pipeline_mode = #tpu.pipeline_mode<synchronous>, transform_indices = @transform_4, window_bounds = array<i64: 32, 1>}, {pipeline_mode = #tpu.pipeline_mode<synchronous>, transform_indices = @transform_5, window_bounds = array<i64: 32, 1>}, {pipeline_mode = #tpu.pipeline_mode<synchronous>, transform_indices = @transform_6, window_bounds = array<i64: 1, 1>}, {transform_indices = @transform_7, window_bounds = array<i64: 1, 128>}]} {
    %c0 = arith.constant 0 : index
    %c0_0 = arith.constant 0 : index
    %0 = vector.load %arg2[%c0, %c0_0] : memref<64x2xf32, #tpu.memory_space<vmem>>, vector<64x2xf32>
    %c0_1 = arith.constant 0 : index
    %c0_2 = arith.constant 0 : index
    %1 = vector.load %arg3[%c0_1, %c0_2] : memref<64x1xf32, #tpu.memory_space<vmem>>, vector<64x1xf32>
    %c0_3 = arith.constant 0 : index
    %c0_4 = arith.constant 0 : index
    %2 = vector.load %arg4[%c0_3, %c0_4] : memref<32x64xf32, #tpu.memory_space<vmem>>, vector<32x64xf32>
    %c0_5 = arith.constant 0 : index
    %c0_6 = arith.constant 0 : index
    %3 = vector.load %arg5[%c0_5, %c0_6] : memref<32x1xf32, #tpu.memory_space<vmem>>, vector<32x1xf32>
    %c0_7 = arith.constant 0 : index
    %c0_8 = arith.constant 0 : index
    %4 = vector.load %arg6[%c0_7, %c0_8] : memref<32x1xf32, #tpu.memory_space<vmem>>, vector<32x1xf32>
    %c0_9 = arith.constant 0 : index
    %c0_10 = arith.constant 0 : index
    %5 = vector.load %arg7[%c0_9, %c0_10] : memref<1x1xf32, #tpu.memory_space<vmem>>, vector<1x1xf32>
    %c0_11 = arith.constant 0 : index
    %c0_12 = arith.constant 0 : index
    %6 = vector.load %arg1[%c0_11, %c0_12] : memref<2x128xf32, #tpu.memory_space<vmem>>, vector<2x128xf32>
    %7 = vector.extract_strided_slice %0 {offsets = [0, 0], sizes = [64, 1], strides = [1, 1]} : vector<64x2xf32> to vector<64x1xf32>
    %8 = vector.extract_strided_slice %6 {offsets = [0, 0], sizes = [1, 128], strides = [1, 1]} : vector<2x128xf32> to vector<1x128xf32>
    %9 = vector.broadcast %7 : vector<64x1xf32> to vector<64x128xf32>
    %10 = vector.broadcast %8 : vector<1x128xf32> to vector<64x128xf32>
    %11 = arith.mulf %9, %10 : vector<64x128xf32>
    %12 = vector.extract_strided_slice %0 {offsets = [0, 1], sizes = [64, 1], strides = [1, 1]} : vector<64x2xf32> to vector<64x1xf32>
    %13 = vector.extract_strided_slice %6 {offsets = [1, 0], sizes = [1, 128], strides = [1, 1]} : vector<2x128xf32> to vector<1x128xf32>
    %14 = vector.broadcast %12 : vector<64x1xf32> to vector<64x128xf32>
    %15 = vector.broadcast %13 : vector<1x128xf32> to vector<64x128xf32>
    %16 = arith.mulf %14, %15 : vector<64x128xf32>
    %17 = arith.addf %11, %16 : vector<64x128xf32>
    %18 = vector.broadcast %1 : vector<64x1xf32> to vector<64x128xf32>
    %19 = arith.addf %17, %18 : vector<64x128xf32>
    %cst = arith.constant 0.000000e+00 : f32
    %20 = vector.broadcast %cst : f32 to vector<64x128xf32>
    %21 = arith.maximumf %19, %20 : vector<64x128xf32>
    %cst_13 = arith.constant dense<0.000000e+00> : vector<32x128xf32>
    %22 = tpu.matmul %2, %21, %cst_13 {dimension_numbers = #tpu.dot_dimension_numbers<[1], [0], [0], [1], [0, 0, 1, 1], [], []>} : vector<32x64xf32>, vector<64x128xf32>, vector<32x128xf32> -> vector<32x128xf32>
    %23 = vector.broadcast %3 : vector<32x1xf32> to vector<32x128xf32>
    %24 = arith.addf %22, %23 : vector<32x128xf32>
    %cst_14 = arith.constant 0.000000e+00 : f32
    %25 = vector.broadcast %cst_14 : f32 to vector<32x128xf32>
    %26 = arith.maximumf %24, %25 : vector<32x128xf32>
    %27 = vector.broadcast %4 : vector<32x1xf32> to vector<32x128xf32>
    %28 = arith.mulf %27, %26 : vector<32x128xf32>
    %cst_15 = arith.constant dense<0.000000e+00> : vector<128xf32>
    %29 = vector.multi_reduction <add>, %28, %cst_15 [0] : vector<32x128xf32> to vector<128xf32>
    %30 = vector.shape_cast %29 : vector<128xf32> to vector<1x128xf32>
    %31 = vector.broadcast %5 : vector<1x1xf32> to vector<1x128xf32>
    %32 = arith.addf %30, %31 : vector<1x128xf32>
    %c0_16 = arith.constant 0 : index
    %c0_17 = arith.constant 0 : index
    %33 = vector.load %arg8[%c0_16, %c0_17] : memref<1x128xf32, #tpu.memory_space<vmem>>, vector<1x128xf32>
    tpu.vector_store %arg8[%c0_16, %c0_17], %32 {strides = array<i32>} : memref<1x128xf32, #tpu.memory_space<vmem>>, vector<1x128xf32>,
    return
  }
  func.func @transform_0(%arg0: i32) -> (i32, i32) {
    %c0_i32 = arith.constant 0 : i32
    %c0_i32_0 = arith.constant 0 : i32
    return %c0_i32, %arg0 : i32, i32
  }
  func.func @transform_1(%arg0: i32) -> (i32, i32) {
    %c0_i32 = arith.constant 0 : i32
    %c0_i32_0 = arith.constant 0 : i32
    %c0_i32_1 = arith.constant 0 : i32
    return %c0_i32, %c0_i32_0 : i32, i32
  }
  func.func @transform_2(%arg0: i32) -> (i32, i32) {
    %c0_i32 = arith.constant 0 : i32
    %c0_i32_0 = arith.constant 0 : i32
    %c0_i32_1 = arith.constant 0 : i32
    return %c0_i32, %c0_i32_0 : i32, i32
  }
  func.func @transform_3(%arg0: i32) -> (i32, i32) {
    %c0_i32 = arith.constant 0 : i32
    %c0_i32_0 = arith.constant 0 : i32
    %c0_i32_1 = arith.constant 0 : i32
    return %c0_i32, %c0_i32_0 : i32, i32
  }
  func.func @transform_4(%arg0: i32) -> (i32, i32) {
    %c0_i32 = arith.constant 0 : i32
    %c0_i32_0 = arith.constant 0 : i32
    %c0_i32_1 = arith.constant 0 : i32
    return %c0_i32, %c0_i32_0 : i32, i32
  }
  func.func @transform_5(%arg0: i32) -> (i32, i32) {
    %c0_i32 = arith.constant 0 : i32
    %c0_i32_0 = arith.constant 0 : i32
    %c0_i32_1 = arith.constant 0 : i32
    return %c0_i32, %c0_i32_0 : i32, i32
  }
  func.func @transform_6(%arg0: i32) -> (i32, i32) {
    %c0_i32 = arith.constant 0 : i32
    %c0_i32_0 = arith.constant 0 : i32
    %c0_i32_1 = arith.constant 0 : i32
    return %c0_i32, %c0_i32_0 : i32, i32
  }
  func.func @transform_7(%arg0: i32) -> (i32, i32) {
    %c0_i32 = arith.constant 0 : i32
    %c0_i32_0 = arith.constant 0 : i32
    return %c0_i32, %arg0 : i32, i32
  }
}

</mosaic_0001>

<llo_original>
// kernel: tpu_custom_call.1
$region0: #{tpu_custom_call.1}
  #allocation0 [shape = 'u32[]', space=smem, size = 0x4, offset = 0x4, fixed_abs, tag = 'smem constant byte address 0x4 - core index']
  #allocation1 [shape = 'u32[72,128]{1,0:T(1,128)}', space=vmem, size = 0x9000, scoped, tag = 'internal scratch']
  #allocation2 [shape = 'f32[1,1]{1,0:T(1,128)S(1)}', space=vmem, size = 0x200, scoped, tag = 'scoped memory for tpu_custom_call.1']
  %s0 = inlined_call_operand.vmem [shape: f32[2,128], index: 0, kind: input, shape index: {}]
  %s1 = inlined_call_operand.vmem [shape: f32[64,2], index: 1, kind: input, shape index: {}]
  %s2 = inlined_call_operand.vmem [shape: f32[64,1], index: 2, kind: input, shape index: {}]
  %s3 = inlined_call_operand.vmem [shape: f32[32,64], index: 3, kind: input, shape index: {}]
  %s4 = inlined_call_operand.vmem [shape: f32[32,1], index: 4, kind: input, shape index: {}]
  %s5 = inlined_call_operand.vmem [shape: f32[32,1], index: 5, kind: input, shape index: {}]
  %s6 = inlined_call_operand.<no memory space> [shape: f32[1,1], index: 6, kind: input, shape index: {}]
  %s7 = inlined_call_operand.hbm [shape: f32[1,128], index: 7, kind: output, shape index: {}]
  %s8 = sld [smem:[#allocation0]]
  $region38: #{tpu_custom_call.1} parent=0
    _
  %s10 = ssub.s32 1, %s8
  %s11 = scalar_select 0, %s10, %s8
  %v12 = vstv %s6
  %13 = vst [vmem:[#allocation2] sm:$0x1] %v12
  $region1: #{tpu_custom_call.1} parent=0
    #allocation3 [shape = 'u8[512]{0}', space=vmem, size = 0x400, scoped, tag = 'output window, operand 0, single buffered']
    #allocation4 [shape = 's32[1]{0}', space=sflag, size = 0x4, scoped, tag = 'scoped memory for tpu_custom_call.1']
    %14 = vsyncpa [#allocation4], 0
    // Predicated region
    $region2: #{tpu_custom_call.1} parent=1 // pred_check
      _
    $region3: #{tpu_custom_call.1} parent=1 // pred_check_branch
      %16 = sbr.rel (0) target = $region5
    $region4: #{tpu_custom_call.1} parent=1 // pred_region
      _
    $region5: #{tpu_custom_call.1} parent=1 // pred_fallthru
      _
    // Predicated region
    $region6: #{tpu_custom_call.1} parent=1 // pred_check
      _
    $region7: #{tpu_custom_call.1} parent=1 // pred_check_branch
      %18 = sbr.rel (0) target = $region9
    $region8: #{tpu_custom_call.1} parent=1 // pred_region
      _
    $region9: #{tpu_custom_call.1} parent=1 // pred_fallthru
      _
    // Predicated region
    $region10: #{tpu_custom_call.1} parent=1 // pred_check
      _
    $region11: #{tpu_custom_call.1} parent=1 // pred_check_branch
      %20 = sbr.rel (0) target = $region13
    $region12: #{tpu_custom_call.1} parent=1 // pred_region
      _
    $region13: #{tpu_custom_call.1} parent=1 // pred_fallthru
      _
    // Predicated region
    $region14: #{tpu_custom_call.1} parent=1 // pred_check
      _
    $region15: #{tpu_custom_call.1} parent=1 // pred_check_branch
      %22 = sbr.rel (0) target = $region17
    $region16: #{tpu_custom_call.1} parent=1 // pred_region
      _
    $region17: #{tpu_custom_call.1} parent=1 // pred_fallthru
      _
    // Predicated region
    $region18: #{tpu_custom_call.1} parent=1 // pred_check
      _
    $region19: #{tpu_custom_call.1} parent=1 // pred_check_branch
      %24 = sbr.rel (0) target = $region21
    $region20: #{tpu_custom_call.1} parent=1 // pred_region
      _
    $region21: #{tpu_custom_call.1} parent=1 // pred_fallthru
      _
    // Predicated region
    $region22: #{tpu_custom_call.1} parent=1 // pred_check
      _
    $region23: #{tpu_custom_call.1} parent=1 // pred_check_branch
      %26 = sbr.rel (0) target = $region25
    $region24: #{tpu_custom_call.1} parent=1 // pred_region
      _
    $region25: #{tpu_custom_call.1} parent=1 // pred_fallthru
      _
    // Predicated region
    $region26: #{tpu_custom_call.1} parent=1 // pred_check
      _
    $region27: #{tpu_custom_call.1} parent=1 // pred_check_branch
      %28 = sbr.rel (0) target = $region29
    $region28: #{tpu_custom_call.1} parent=1 // pred_region
      _
    $region29: #{tpu_custom_call.1} parent=1 // pred_fallthru
      _
    %v29 = vld [vmem:[%s1] sm:$0xff]
    %v30 = vld [vmem:[%s1 + $0x8] sm:$0xff]
    %v31 = vld [vmem:[%s1 + $0x10] sm:$0xff]
    %v32 = vld [vmem:[%s1 + $0x18] sm:$0xff]
    %v33 = vld [vmem:[%s1 + $0x20] sm:$0xff]
    %v34 = vld [vmem:[%s1 + $0x28] sm:$0xff]
    %v35 = vld [vmem:[%s1 + $0x30] sm:$0xff]
    %v36 = vld [vmem:[%s1 + $0x38] sm:$0xff]
    %v37 = vld [vmem:[%s2] sm:$0xff]
    %v38 = vld [vmem:[%s2 + $0x8] sm:$0xff]
    %v39 = vld [vmem:[%s2 + $0x10] sm:$0xff]
    %v40 = vld [vmem:[%s2 + $0x18] sm:$0xff]
    %v41 = vld [vmem:[%s2 + $0x20] sm:$0xff]
    %v42 = vld [vmem:[%s2 + $0x28] sm:$0xff]
    %v43 = vld [vmem:[%s2 + $0x30] sm:$0xff]
    %v44 = vld [vmem:[%s2 + $0x38] sm:$0xff]
    %v45 = vld [vmem:[%s3] sm:$0xff]
    %v46 = vld [vmem:[%s3 + $0x8] sm:$0xff]
    %v47 = vld [vmem:[%s3 + $0x10] sm:$0xff]
    %v48 = vld [vmem:[%s3 + $0x18] sm:$0xff]
    %v49 = vld [vmem:[%s4] sm:$0xff]
    %v50 = vld [vmem:[%s4 + $0x8] sm:$0xff]
    %v51 = vld [vmem:[%s4 + $0x10] sm:$0xff]
    %v52 = vld [vmem:[%s4 + $0x18] sm:$0xff]
    %v53 = vld [vmem:[%s5] sm:$0xff]
    %v54 = vld [vmem:[%s5 + $0x8] sm:$0xff]
    %v55 = vld [vmem:[%s5 + $0x10] sm:$0xff]
    %v56 = vld [vmem:[%s5 + $0x18] sm:$0xff]
    %v57 = vld [vmem:[#allocation2] sm:$0x1]
    %v58 = vld [vmem:[%s0] sm:$0x3]
    %60 = vset.pattern.permute.xlu0 0
    %61 = vperm.xlu0 %60, %v29
    %v62 = vpop.permute.xlu0 %61
    %65 = vset.pattern.permute.xlu0 0
    %66 = vperm.xlu0 %65, %v30
    %v67 = vpop.permute.xlu0 %66
    %70 = vset.pattern.permute.xlu0 0
    %71 = vperm.xlu0 %70, %v31
    %v72 = vpop.permute.xlu0 %71
    %75 = vset.pattern.permute.xlu0 0
    %76 = vperm.xlu0 %75, %v32
    %v77 = vpop.permute.xlu0 %76
    %80 = vset.pattern.permute.xlu0 0
    %81 = vperm.xlu0 %80, %v33
    %v82 = vpop.permute.xlu0 %81
    %85 = vset.pattern.permute.xlu0 0
    %86 = vperm.xlu0 %85, %v34
    %v87 = vpop.permute.xlu0 %86
    %90 = vset.pattern.permute.xlu0 0
    %91 = vperm.xlu0 %90, %v35
    %v92 = vpop.permute.xlu0 %91
    %95 = vset.pattern.permute.xlu0 0
    %96 = vperm.xlu0 %95, %v36
    %v97 = vpop.permute.xlu0 %96
    %v99 = vperm.slane %v58, 0
    %v100 = vmul.f32 %v62, %v99
    %v101 = vmul.f32 %v67, %v99
    %v102 = vmul.f32 %v72, %v99
    %v103 = vmul.f32 %v77, %v99
    %v104 = vmul.f32 %v82, %v99
    %v105 = vmul.f32 %v87, %v99
    %v106 = vmul.f32 %v92, %v99
    %v107 = vmul.f32 %v97, %v99
    %108 = vset.pattern.permute.xlu0 1
    %109 = vperm.xlu0 %108, %v29
    %v110 = vpop.permute.xlu0 %109
    %112 = vset.pattern.permute.xlu0 1
    %113 = vperm.xlu0 %112, %v30
    %v114 = vpop.permute.xlu0 %113
    %116 = vset.pattern.permute.xlu0 1
    %117 = vperm.xlu0 %116, %v31
    %v118 = vpop.permute.xlu0 %117
    %120 = vset.pattern.permute.xlu0 1
    %121 = vperm.xlu0 %120, %v32
    %v122 = vpop.permute.xlu0 %121
    %124 = vset.pattern.permute.xlu0 1
    %125 = vperm.xlu0 %124, %v33
    %v126 = vpop.permute.xlu0 %125
    %128 = vset.pattern.permute.xlu0 1
    %129 = vperm.xlu0 %128, %v34
    %v130 = vpop.permute.xlu0 %129
    %132 = vset.pattern.permute.xlu0 1
    %133 = vperm.xlu0 %132, %v35
    %v134 = vpop.permute.xlu0 %133
    %136 = vset.pattern.permute.xlu0 1
    %137 = vperm.xlu0 %136, %v36
    %v138 = vpop.permute.xlu0 %137
    %v140 = vperm.slane %v58, 1
    %v141 = vmul.f32 %v110, %v140
    %v142 = vmul.f32 %v114, %v140
    %v143 = vmul.f32 %v118, %v140
    %v144 = vmul.f32 %v122, %v140
    %v145 = vmul.f32 %v126, %v140
    %v146 = vmul.f32 %v130, %v140
    %v147 = vmul.f32 %v134, %v140
    %v148 = vmul.f32 %v138, %v140
    %v149 = vadd.f32 %v100, %v141
    %v150 = vadd.f32 %v101, %v142
    %v151 = vadd.f32 %v102, %v143
    %v152 = vadd.f32 %v103, %v144
    %v153 = vadd.f32 %v104, %v145
    %v154 = vadd.f32 %v105, %v146
    %v155 = vadd.f32 %v106, %v147
    %v156 = vadd.f32 %v107, %v148
    %158 = vset.pattern.permute.xlu0 0
    %159 = vperm.xlu0 %158, %v37
    %v160 = vpop.permute.xlu0 %159
    %163 = vset.pattern.permute.xlu0 0
    %164 = vperm.xlu0 %163, %v38
    %v165 = vpop.permute.xlu0 %164
    %168 = vset.pattern.permute.xlu0 0
    %169 = vperm.xlu0 %168, %v39
    %v170 = vpop.permute.xlu0 %169
    %173 = vset.pattern.permute.xlu0 0
    %174 = vperm.xlu0 %173, %v40
    %v175 = vpop.permute.xlu0 %174
    %178 = vset.pattern.permute.xlu0 0
    %179 = vperm.xlu0 %178, %v41
    %v180 = vpop.permute.xlu0 %179
    %183 = vset.pattern.permute.xlu0 0
    %184 = vperm.xlu0 %183, %v42
    %v185 = vpop.permute.xlu0 %184
    %188 = vset.pattern.permute.xlu0 0
    %189 = vperm.xlu0 %188, %v43
    %v190 = vpop.permute.xlu0 %189
    %193 = vset.pattern.permute.xlu0 0
    %194 = vperm.xlu0 %193, %v44
    %v195 = vpop.permute.xlu0 %194
    %v197 = vadd.f32 %v149, %v160
    %v198 = vadd.f32 %v150, %v165
    %v199 = vadd.f32 %v151, %v170
    %v200 = vadd.f32 %v152, %v175
    %v201 = vadd.f32 %v153, %v180
    %v202 = vadd.f32 %v154, %v185
    %v203 = vadd.f32 %v155, %v190
    %v204 = vadd.f32 %v156, %v195
    %v205 = vmax.f32 %v197, 0.0
    %v206 = vmax.f32 %v198, 0.0
    %v207 = vmax.f32 %v199, 0.0
    %v208 = vmax.f32 %v200, 0.0
    %v209 = vmax.f32 %v201, 0.0
    %v210 = vmax.f32 %v202, 0.0
    %v211 = vmax.f32 %v203, 0.0
    %v212 = vmax.f32 %v204, 0.0
    %214 = vset.pattern.permute.xlu0 0
    %215 = vperm.xlu0 %214, %v49
    %v216 = vpop.permute.xlu0 %215
    %219 = vset.pattern.permute.xlu0 0
    %220 = vperm.xlu0 %219, %v50
    %v221 = vpop.permute.xlu0 %220
    %224 = vset.pattern.permute.xlu0 0
    %225 = vperm.xlu0 %224, %v51
    %v226 = vpop.permute.xlu0 %225
    %229 = vset.pattern.permute.xlu0 0
    %230 = vperm.xlu0 %229, %v52
    %v231 = vpop.permute.xlu0 %230
    %vm233 = vcmask 523264
    %v235 = vsel %vm233, %v45, 0
    %v238 = vsel %vm233, %v46, 0
    %v241 = vsel %vm233, %v47, 0
    %v244 = vsel %vm233, %v48, 0
    %246 = vmatpush.msra.mxu0 0.0
    %247 = vmatpush.msra.mxu0 0.0
    %248 = vmatpush.msra.mxu0 0.0
    %249 = vmatpush.msra.mxu0 0.0
    %250 = vmatpush.msra.mxu0 0.0
    %251 = vmatpush.msra.mxu0 0.0
    %252 = vmatpush.msra.mxu0 0.0
    %253 = vmatpush.msra.mxu0 0.0
    %254 = vmatpush.msra.mxu0 %v212
    %255 = vmatpush.msra.mxu0 %v211
    %256 = vmatpush.msra.mxu0 %v210
    %257 = vmatpush.msra.mxu0 %v209
    %258 = vmatpush.msra.mxu0 %v208
    %259 = vmatpush.msra.mxu0 %v207
    %260 = vmatpush.msra.mxu0 %v206
    %261 = vmatpush.msra.mxu0 %v205
    %262 = vmatmul.f32.gmra.mxu0 %v235
    %v263 = vpop.f32.mrf.mxu0
    %v264 = vadd.f32 %v216, %v263
    %265 = vmatmul.f32.gmra.mxu0 %v238
    %v266 = vpop.f32.mrf.mxu0
    %v267 = vadd.f32 %v221, %v266
    %268 = vmatmul.f32.gmra.mxu0 %v241
    %v269 = vpop.f32.mrf.mxu0
    %v270 = vadd.f32 %v226, %v269
    %271 = vmatmul.f32.gmra.mxu0 %v244
    %v272 = vpop.f32.mrf.mxu0
    %v273 = vadd.f32 %v231, %v272
    %274 = vdwg.mxu0
    %v275 = vmax.f32 %v264, 0.0
    %v276 = vmax.f32 %v267, 0.0
    %v277 = vmax.f32 %v270, 0.0
    %v278 = vmax.f32 %v273, 0.0
    %280 = vset.pattern.permute.xlu0 0
    %281 = vperm.xlu0 %280, %v53
    %v282 = vpop.permute.xlu0 %281
    %285 = vset.pattern.permute.xlu0 0
    %286 = vperm.xlu0 %285, %v54
    %v287 = vpop.permute.xlu0 %286
    %290 = vset.pattern.permute.xlu0 0
    %291 = vperm.xlu0 %290, %v55
    %v292 = vpop.permute.xlu0 %291
    %295 = vset.pattern.permute.xlu0 0
    %296 = vperm.xlu0 %295, %v56
    %v297 = vpop.permute.xlu0 %296
    %v299 = vmul.f32 %v282, %v275
    %v300 = vmul.f32 %v287, %v276
    %v301 = vmul.f32 %v292, %v277
    %v302 = vmul.f32 %v297, %v278
    %v303 = vadd.f32 %v299, %v300
    %v304 = vadd.f32 %v303, %v301
    %v305 = vadd.f32 %v304, %v302
    %v306 = vrot.slane %v305, 4
    %v307 = vadd.f32 %v305, %v306
    %v308 = vrot.slane %v307, 2
    %v309 = vadd.f32 %v307, %v308
    %v310 = vrot.slane %v309, 1
    %v311 = vadd.f32 %v309, %v310
    %313 = vset.pattern.permute.xlu0 0
    %314 = vperm.xlu0 %313, %v57
    %v315 = vpop.permute.xlu0 %314
    %v317 = vperm.slane %v315, 0
    %v318 = vadd.f32 %v311, %v317
    %319 = vst [vmem:[#allocation3] sm:$0x1] %v318
    // Predicated region
    $region30: #{tpu_custom_call.1} parent=1 // pred_check
      _
    $region31: #{tpu_custom_call.1} parent=1 // pred_check_branch
      %321 = sbr.rel (0) target = $region33
    $region32: #{tpu_custom_call.1} parent=1 // pred_region
      %323 = vsyncadd [#allocation4], 0
      %s325 = sshll.u32 [#allocation3], 4
      %s326 = int_to_ptr.vmem [resolvable:$true] %s325
      %s327 = sshll.u32 %s7, 4
      %s328 = int_to_ptr.hbm [resolvable:$true] %s327
      %330 = dma.vmem_to_hbm [thread:$0]  %s326, 16, %s328, [#allocation4]
    $region33: #{tpu_custom_call.1} parent=1 // pred_fallthru
      _
    // Predicated region
    $region34: #{tpu_custom_call.1} parent=1 // pred_check
      _
    $region35: #{tpu_custom_call.1} parent=1 // pred_check_branch
      %332 = sbr.rel (0) target = $region37
    $region36: #{tpu_custom_call.1} parent=1 // pred_region
      %334 = dma.done [#allocation4], 16
    $region37: #{tpu_custom_call.1} parent=1 // pred_fallthru
      _
    %335 = vsyncpa [#allocation4], 1

</llo_original>
